<compile_context>
chip_gen: v6e
topology: v6e:2x2x1
jax: 0.10.0
libtpu: 0.0.40
codegen_flags: <defaults>
</compile_context>

<pallas_src>
import jax
import jax.numpy as jnp
from jax.experimental import pallas as pl
from jax.experimental.pallas import tpu as pltpu

LEAKY_SLOPE = 0.01   # nn.LeakyReLU default negative_slope
LN_EPS = 1e-5        # nn.LayerNorm default eps


def _leaky(x):
    # valid for 0 < slope < 1: max(x, s*x) == leaky_relu(x)
    return jnp.maximum(x, LEAKY_SLOPE * x)


def _round_up(x, m):
    return ((x + m - 1) // m) * m


# ---------------------------------------------------------------------------
# Fused kernel: transition MLP + projection MLP for one batch tile
# ---------------------------------------------------------------------------
def _spr_decoder_kernel(z_ref, a_ref,
                        w1z_ref, w1a_ref, b1_ref,
                        w2_ref, b2_ref, g_ref, beta_ref,
                        w3_ref, b3_ref,
                        w4_ref, b4_ref,
                        o_ref):
    cdt = w1z_ref.dtype                      # MXU compute dtype (bf16 by default)
    z = z_ref[...]                           # (tm, L) f32
    a = a_ref[...]                           # (tm, A) f32
    A = a.shape[-1]                          # static

    # ---- transition: Linear -> LeakyReLU -> Linear -> LayerNorm -> Tanh ----
    h = (jnp.dot(z.astype(cdt), w1z_ref[...], preferred_element_type=jnp.float32)
         + b1_ref[...])
    if A <= 8:
        # K=A matmul fills <2% of the MXU; do A broadcast multiply-adds on the
        # VPU instead (w1a kept f32 -- no bf16 VPU dependence, v5e-safe).
        for j in range(A):                   # static unroll, A is tiny
            h = h + a[:, j:j + 1] * w1a_ref[j, :]
    else:
        h = h + jnp.dot(a.astype(cdt), w1a_ref[...].astype(cdt),
                        preferred_element_type=jnp.float32)
    h = _leaky(h)

    c = jnp.dot(h.astype(cdt), w2_ref[...],
                preferred_element_type=jnp.float32) + b2_ref[...]
    # one-pass LayerNorm moments: E[x] and E[x^2] are independent reductions
    mu = jnp.mean(c, axis=-1, keepdims=True)
    msq = jnp.mean(c * c, axis=-1, keepdims=True)
    var = jnp.maximum(msq - mu * mu, 0.0)          # biased variance, like PyTorch
    cn = (c - mu) * jax.lax.rsqrt(var + LN_EPS)
    code = jnp.tanh(cn * g_ref[...] + beta_ref[...])

    # ---- projection: Linear -> LeakyReLU -> Linear -> Tanh ----
    p = jnp.dot(code.astype(cdt), w3_ref[...],
                preferred_element_type=jnp.float32) + b3_ref[...]
    p = _leaky(p)
    out = jnp.dot(p.astype(cdt), w4_ref[...],
                  preferred_element_type=jnp.float32) + b4_ref[...]
    o_ref[...] = jnp.tanh(out)


# ---------------------------------------------------------------------------
# Wrapper: batch-tiled pallas_call with resident weights
# ---------------------------------------------------------------------------
def spr_decoder_forward(z, action, params, *, tile_m=1024):
    B, L = z.shape
    A = action.shape[-1]
    H = params["w1z"].shape[1]
    w_dtype = params["w1z"].dtype

    z = z.astype(jnp.float32)
    action = action.astype(jnp.float32)

    # Batch tile: big (amortize ~0.35us/step overhead) but split so that any
    # B > 8 yields >= 2 grid steps (v7x dual-TC sharding via "parallel").
    if B > 8:
        tm = min(tile_m, _round_up(-(-B // 2), 8))
    else:
        tm = 8
    M = _round_up(B, tm)
    if M != B:
        pad = ((0, M - B), (0, 0))
        z = jnp.pad(z, pad)
        action = jnp.pad(action, pad)

    # Sublane-align the action part of W1 (zero rows cost nothing).
    w1a = params["w1a"].astype(jnp.float32)
    if w1a.shape[0] < 8:
        w1a = jnp.pad(w1a, ((0, 8 - w1a.shape[0]), (0, 0)))
    Ap = w1a.shape[0]

    def row_spec(n):
        return pl.BlockSpec((tm, n), lambda i: (i, 0))

    def full_spec(r, c):
        return pl.BlockSpec((r, c), lambda i: (0, 0))

    # ---- right-sized VMEM limit: blocks x2 (double buffer) + f32 intermediates
    def tile_bytes(shape, dtype):
        r = _round_up(shape[0], 8)
        c = _round_up(shape[1], 128)
        return r * c * jnp.dtype(dtype).itemsize

    blocks = [
        ((tm, L), jnp.float32), ((tm, A), jnp.float32),              # z, action
        ((L, H), w_dtype), ((Ap, H), jnp.float32), ((1, H), jnp.float32),
        ((H, L), w_dtype), ((1, L), jnp.float32),
        ((1, L), jnp.float32), ((1, L), jnp.float32),
        ((L, H), w_dtype), ((1, H), jnp.float32),
        ((H, L), w_dtype), ((1, L), jnp.float32),
        ((tm, L), jnp.float32),                                      # output
    ]
    block_bytes = sum(tile_bytes(s, d) for s, d in blocks)
    interm_bytes = 12 * tm * max(H, 128) * 4       # live f32 (tm,H) temporaries
    vmem_limit = 2 * block_bytes + interm_bytes + (2 << 20)
    vmem_limit = int(max(16 << 20, min(vmem_limit, 64 << 20)))

    out = pl.pallas_call(
        _spr_decoder_kernel,
        out_shape=jax.ShapeDtypeStruct((M, L), jnp.float32),
        grid=(M // tm,),
        in_specs=[
            row_spec(L),            # z tile
            row_spec(A),            # action tile
            full_spec(L, H),        # w1 (z part), resident
            full_spec(Ap, H),       # w1 (action part, padded rows), resident
            full_spec(1, H),        # b1
            full_spec(H, L),        # w2
            full_spec(1, L),        # b2
            full_spec(1, L),        # LayerNorm gamma
            full_spec(1, L),        # LayerNorm beta
            full_spec(L, H),        # w3
            full_spec(1, H),        # b3
            full_spec(H, L),        # w4
            full_spec(1, L),        # b4
        ],
        out_specs=row_spec(L),
        compiler_params=pltpu.CompilerParams(
            dimension_semantics=("parallel",),       # v7x dual-TC batch split
            vmem_limit_bytes=vmem_limit,
        ),
    )(z, action,
      params["w1z"], w1a, params["b1"].reshape(1, H),
      params["w2"], params["b2"].reshape(1, L),
      params["ln_g"].reshape(1, L), params["ln_b"].reshape(1, L),
      params["w3"], params["b3"].reshape(1, H),
      params["w4"], params["b4"].reshape(1, L))

    return out[:B]


# ---------------------------------------------------------------------------
# Pure-JAX fp32 reference (same weights) for tolerance checks
# ---------------------------------------------------------------------------
def spr_decoder_ref(z, action, params):
    f32 = jnp.float32
    w1 = jnp.concatenate([params["w1z"].astype(f32), params["w1a"].astype(f32)], axis=0)
    x = jnp.concatenate([z.astype(f32), action.astype(f32)], axis=1)
    h = x @ w1 + params["b1"]
    h = jnp.where(h > 0, h, LEAKY_SLOPE * h)
    c = h @ params["w2"].astype(f32) + params["b2"]
    mu = c.mean(-1, keepdims=True)
    var = ((c - mu) ** 2).mean(-1, keepdims=True)
    code = jnp.tanh((c - mu) / jnp.sqrt(var + LN_EPS) * params["ln_g"] + params["ln_b"])
    p = code @ params["w3"].astype(f32) + params["b3"]
    p = jnp.where(p > 0, p, LEAKY_SLOPE * p)
    return jnp.tanh(p @ params["w4"].astype(f32) + params["b4"])


# ---------------------------------------------------------------------------
# Parameter init (PyTorch-default-style uniform bounds), deterministic
# ---------------------------------------------------------------------------
def init_params(key, latent_dim, action_dim, hidden_dim=256,
                *, compute_dtype=jnp.bfloat16):
    keys = jax.random.split(key, 8)

    def unif(kk, shape, fan_in, dtype=jnp.float32):
        bound = 1.0 / jnp.sqrt(fan_in)
        return jax.random.uniform(kk, shape, jnp.float32, -bound, bound).astype(dtype)

    in1 = latent_dim + action_dim
    # Linear weights stored as (in, out) == transpose of PyTorch (out, in).
    # W1 is split along its input axis so concat([z, action]) is never built.
    w1 = unif(keys[0], (in1, hidden_dim), in1, jnp.float32)
    return {
        "w1z": w1[:latent_dim].astype(compute_dtype),
        "w1a": w1[latent_dim:],                           # stays f32 (VPU path)
        "b1": unif(keys[1], (hidden_dim,), in1),
        "w2": unif(keys[2], (hidden_dim, latent_dim), hidden_dim, compute_dtype),
        "b2": unif(keys[3], (latent_dim,), hidden_dim),
        "ln_g": jnp.ones((latent_dim,), jnp.float32),
        "ln_b": jnp.zeros((latent_dim,), jnp.float32),
        "w3": unif(keys[4], (latent_dim, hidden_dim), latent_dim, compute_dtype),
        "b3": unif(keys[5], (hidden_dim,), latent_dim),
        "w4": unif(keys[6], (hidden_dim, latent_dim), hidden_dim, compute_dtype),
        "b4": unif(keys[7], (latent_dim,), hidden_dim),
    }


if __name__ == "__main__":
    latent_dim, action_dim = 32, 4
    hidden_dim = 256                     # layers_dim=[256] default

    key = jax.random.PRNGKey(0)
    kz, ka, kp, kz2, ka2 = jax.random.split(key, 5)
    params = init_params(kp, latent_dim, action_dim, hidden_dim)

    # small case (B=2, single grid step, batch padded to sublane)
    B = 2
    z = jax.random.normal(kz, (B, latent_dim), jnp.float32)
    action = jax.random.uniform(ka, (B, action_dim), jnp.float32, -1.0, 1.0)
    proj = jax.block_until_ready(spr_decoder_forward(z, action, params))
    ref = spr_decoder_ref(z, action, params)
    assert proj.shape == (B, latent_dim), proj.shape
    assert bool(jnp.all(jnp.isfinite(proj)))
    assert bool(jnp.all(jnp.abs(proj) <= 1.0))                 # tanh range
    assert bool(jnp.allclose(proj, ref, atol=5e-2)), float(jnp.abs(proj - ref).max())

    # larger case exercising a multi-step ("parallel") grid with batch padding
    B2 = 300
    z2 = jax.random.normal(kz2, (B2, latent_dim), jnp.float32)
    action2 = jax.random.uniform(ka2, (B2, action_dim), jnp.float32, -1.0, 1.0)
    proj2 = jax.block_until_ready(spr_decoder_forward(z2, action2, params))
    ref2 = spr_decoder_ref(z2, action2, params)
    assert proj2.shape == (B2, latent_dim), proj2.shape
    assert bool(jnp.all(jnp.isfinite(proj2)))
    assert bool(jnp.allclose(proj2, ref2, atol=5e-2)), float(jnp.abs(proj2 - ref2).max())

    print("KERNEL_OK")
</pallas_src>

<mosaic_0001>
module attributes {stable_mosaic.version = 11 : i64} {
  func.func @_spr_decoder_kernel(%arg0: i32, %arg1: memref<8x32xf32, #tpu.memory_space<vmem>>, %arg2: memref<8x4xf32, #tpu.memory_space<vmem>>, %arg3: memref<32x256xbf16, #tpu.memory_space<vmem>>, %arg4: memref<8x256xf32, #tpu.memory_space<vmem>>, %arg5: memref<1x256xf32, #tpu.memory_space<vmem>>, %arg6: memref<256x32xbf16, #tpu.memory_space<vmem>>, %arg7: memref<1x32xf32, #tpu.memory_space<vmem>>, %arg8: memref<1x32xf32, #tpu.memory_space<vmem>>, %arg9: memref<1x32xf32, #tpu.memory_space<vmem>>, %arg10: memref<32x256xbf16, #tpu.memory_space<vmem>>, %arg11: memref<1x256xf32, #tpu.memory_space<vmem>>, %arg12: memref<256x32xbf16, #tpu.memory_space<vmem>>, %arg13: memref<1x32xf32, #tpu.memory_space<vmem>>, %arg14: memref<8x32xf32, #tpu.memory_space<vmem>>) attributes {dimension_semantics = [#tpu.dimension_semantics<parallel>], iteration_bounds = array<i64: 1>, scalar_prefetch = 0 : i64, scratch_operands = 0 : i64, tpu.core_type = #tpu.core_type<tc>, window_params = [{transform_indices = @transform_0, window_bounds = array<i64: 8, 32>}, {transform_indices = @transform_1, window_bounds = array<i64: 8, 4>}, {pipeline_mode = #tpu.pipeline_mode<synchronous>, transform_indices = @transform_2, window_bounds = array<i64: 32, 256>}, {pipeline_mode = #tpu.pipeline_mode<synchronous>, transform_indices = @transform_3, window_bounds = array<i64: 8, 256>}, {pipeline_mode = #tpu.pipeline_mode<synchronous>, transform_indices = @transform_4, window_bounds = array<i64: 1, 256>}, {pipeline_mode = #tpu.pipeline_mode<synchronous>, transform_indices = @transform_5, window_bounds = array<i64: 256, 32>}, {pipeline_mode = #tpu.pipeline_mode<synchronous>, transform_indices = @transform_6, window_bounds = array<i64: 1, 32>}, {pipeline_mode = #tpu.pipeline_mode<synchronous>, transform_indices = @transform_7, window_bounds = array<i64: 1, 32>}, {pipeline_mode = #tpu.pipeline_mode<synchronous>, transform_indices = @transform_8, window_bounds = array<i64: 1, 32>}, {pipeline_mode = #tpu.pipeline_mode<synchronous>, transform_indices = @transform_9, window_bounds = array<i64: 32, 256>}, {pipeline_mode = #tpu.pipeline_mode<synchronous>, transform_indices = @transform_10, window_bounds = array<i64: 1, 256>}, {pipeline_mode = #tpu.pipeline_mode<synchronous>, transform_indices = @transform_11, window_bounds = array<i64: 256, 32>}, {pipeline_mode = #tpu.pipeline_mode<synchronous>, transform_indices = @transform_12, window_bounds = array<i64: 1, 32>}, {transform_indices = @transform_13, window_bounds = array<i64: 8, 32>}]} {
    %c0 = arith.constant 0 : index
    %c0_0 = arith.constant 0 : index
    %0 = vector.load %arg1[%c0, %c0_0] : memref<8x32xf32, #tpu.memory_space<vmem>>, vector<8x32xf32>
    %c0_1 = arith.constant 0 : index
    %c0_2 = arith.constant 0 : index
    %1 = vector.load %arg2[%c0_1, %c0_2] : memref<8x4xf32, #tpu.memory_space<vmem>>, vector<8x4xf32>
    %2 = arith.truncf %0 : vector<8x32xf32> to vector<8x32xbf16>
    %c0_3 = arith.constant 0 : index
    %c0_4 = arith.constant 0 : index
    %3 = vector.load %arg3[%c0_3, %c0_4] : memref<32x256xbf16, #tpu.memory_space<vmem>>, vector<32x256xbf16>
    %cst = arith.constant dense<0.000000e+00> : vector<8x256xf32>
    %4 = tpu.matmul %2, %3, %cst {dimension_numbers = #tpu.dot_dimension_numbers<[1], [0], [0], [1], [0, 0, 1, 1], [], []>} : vector<8x32xbf16>, vector<32x256xbf16>, vector<8x256xf32> -> vector<8x256xf32>
    %c0_5 = arith.constant 0 : index
    %c0_6 = arith.constant 0 : index
    %5 = vector.load %arg5[%c0_5, %c0_6] : memref<1x256xf32, #tpu.memory_space<vmem>>, vector<1x256xf32>
    %6 = vector.broadcast %5 : vector<1x256xf32> to vector<8x256xf32>
    %7 = arith.addf %4, %6 : vector<8x256xf32>
    %8 = vector.extract_strided_slice %1 {offsets = [0, 0], sizes = [8, 1], strides = [1, 1]} : vector<8x4xf32> to vector<8x1xf32>
    %c0_7 = arith.constant 0 : index
    %c0_8 = arith.constant 0 : index
    %9 = vector.load %arg4[%c0_7, %c0_8] : memref<8x256xf32, #tpu.memory_space<vmem>>, vector<1x256xf32>
    %10 = vector.shape_cast %9 : vector<1x256xf32> to vector<256xf32>
    %11 = vector.shape_cast %10 : vector<256xf32> to vector<1x256xf32>
    %12 = vector.broadcast %8 : vector<8x1xf32> to vector<8x256xf32>
    %13 = vector.broadcast %11 : vector<1x256xf32> to vector<8x256xf32>
    %14 = arith.mulf %12, %13 : vector<8x256xf32>
    %15 = arith.addf %7, %14 : vector<8x256xf32>
    %16 = vector.extract_strided_slice %1 {offsets = [0, 1], sizes = [8, 1], strides = [1, 1]} : vector<8x4xf32> to vector<8x1xf32>
    %c1 = arith.constant 1 : index
    %c0_9 = arith.constant 0 : index
    %17 = vector.load %arg4[%c1, %c0_9] : memref<8x256xf32, #tpu.memory_space<vmem>>, vector<1x256xf32>
    %18 = vector.shape_cast %17 : vector<1x256xf32> to vector<256xf32>
    %19 = vector.shape_cast %18 : vector<256xf32> to vector<1x256xf32>
    %20 = vector.broadcast %16 : vector<8x1xf32> to vector<8x256xf32>
    %21 = vector.broadcast %19 : vector<1x256xf32> to vector<8x256xf32>
    %22 = arith.mulf %20, %21 : vector<8x256xf32>
    %23 = arith.addf %15, %22 : vector<8x256xf32>
    %24 = vector.extract_strided_slice %1 {offsets = [0, 2], sizes = [8, 1], strides = [1, 1]} : vector<8x4xf32> to vector<8x1xf32>
    %c2 = arith.constant 2 : index
    %c0_10 = arith.constant 0 : index
    %25 = vector.load %arg4[%c2, %c0_10] : memref<8x256xf32, #tpu.memory_space<vmem>>, vector<1x256xf32>
    %26 = vector.shape_cast %25 : vector<1x256xf32> to vector<256xf32>
    %27 = vector.shape_cast %26 : vector<256xf32> to vector<1x256xf32>
    %28 = vector.broadcast %24 : vector<8x1xf32> to vector<8x256xf32>
    %29 = vector.broadcast %27 : vector<1x256xf32> to vector<8x256xf32>
    %30 = arith.mulf %28, %29 : vector<8x256xf32>
    %31 = arith.addf %23, %30 : vector<8x256xf32>
    %32 = vector.extract_strided_slice %1 {offsets = [0, 3], sizes = [8, 1], strides = [1, 1]} : vector<8x4xf32> to vector<8x1xf32>
    %c3 = arith.constant 3 : index
    %c0_11 = arith.constant 0 : index
    %33 = vector.load %arg4[%c3, %c0_11] : memref<8x256xf32, #tpu.memory_space<vmem>>, vector<1x256xf32>
    %34 = vector.shape_cast %33 : vector<1x256xf32> to vector<256xf32>
    %35 = vector.shape_cast %34 : vector<256xf32> to vector<1x256xf32>
    %36 = vector.broadcast %32 : vector<8x1xf32> to vector<8x256xf32>
    %37 = vector.broadcast %35 : vector<1x256xf32> to vector<8x256xf32>
    %38 = arith.mulf %36, %37 : vector<8x256xf32>
    %39 = arith.addf %31, %38 : vector<8x256xf32>
    %cst_12 = arith.constant 0.00999999977 : f32
    %40 = vector.broadcast %cst_12 : f32 to vector<8x256xf32>
    %41 = arith.mulf %40, %39 : vector<8x256xf32>
    %42 = arith.maximumf %39, %41 : vector<8x256xf32>
    %43 = arith.truncf %42 : vector<8x256xf32> to vector<8x256xbf16>
    %c0_13 = arith.constant 0 : index
    %c0_14 = arith.constant 0 : index
    %44 = vector.load %arg6[%c0_13, %c0_14] : memref<256x32xbf16, #tpu.memory_space<vmem>>, vector<256x32xbf16>
    %cst_15 = arith.constant dense<0.000000e+00> : vector<8x32xf32>
    %45 = tpu.matmul %43, %44, %cst_15 {dimension_numbers = #tpu.dot_dimension_numbers<[1], [0], [0], [1], [0, 0, 1, 1], [], []>} : vector<8x256xbf16>, vector<256x32xbf16>, vector<8x32xf32> -> vector<8x32xf32>
    %c0_16 = arith.constant 0 : index
    %c0_17 = arith.constant 0 : index
    %46 = vector.load %arg7[%c0_16, %c0_17] : memref<1x32xf32, #tpu.memory_space<vmem>>, vector<1x32xf32>
    %47 = vector.broadcast %46 : vector<1x32xf32> to vector<8x32xf32>
    %48 = arith.addf %45, %47 : vector<8x32xf32>
    %cst_18 = arith.constant dense<0.000000e+00> : vector<8xf32>
    %49 = vector.multi_reduction <add>, %48, %cst_18 [1] : vector<8x32xf32> to vector<8xf32>
    %50 = vector.shape_cast %49 : vector<8xf32> to vector<8x1xf32>
    %cst_19 = arith.constant 3.200000e+01 : f32
    %51 = vector.broadcast %cst_19 : f32 to vector<8x1xf32>
    %52 = arith.divf %50, %51 : vector<8x1xf32>
    %53 = arith.mulf %48, %48 : vector<8x32xf32>
    %cst_20 = arith.constant dense<0.000000e+00> : vector<8xf32>
    %54 = vector.multi_reduction <add>, %53, %cst_20 [1] : vector<8x32xf32> to vector<8xf32>
    %55 = vector.shape_cast %54 : vector<8xf32> to vector<8x1xf32>
    %cst_21 = arith.constant 3.200000e+01 : f32
    %56 = vector.broadcast %cst_21 : f32 to vector<8x1xf32>
    %57 = arith.divf %55, %56 : vector<8x1xf32>
    %58 = arith.mulf %52, %52 : vector<8x1xf32>
    %59 = arith.subf %57, %58 : vector<8x1xf32>
    %cst_22 = arith.constant 0.000000e+00 : f32
    %60 = vector.broadcast %cst_22 : f32 to vector<8x1xf32>
    %61 = arith.maximumf %59, %60 : vector<8x1xf32>
    %62 = vector.broadcast %52 : vector<8x1xf32> to vector<8x32xf32>
    %63 = arith.subf %48, %62 : vector<8x32xf32>
    %cst_23 = arith.constant 9.99999974E-6 : f32
    %64 = vector.broadcast %cst_23 : f32 to vector<8x1xf32>
    %65 = arith.addf %61, %64 : vector<8x1xf32>
    %66 = math.rsqrt %65 : vector<8x1xf32>
    %67 = vector.broadcast %66 : vector<8x1xf32> to vector<8x32xf32>
    %68 = arith.mulf %63, %67 : vector<8x32xf32>
    %c0_24 = arith.constant 0 : index
    %c0_25 = arith.constant 0 : index
    %69 = vector.load %arg8[%c0_24, %c0_25] : memref<1x32xf32, #tpu.memory_space<vmem>>, vector<1x32xf32>
    %70 = vector.broadcast %69 : vector<1x32xf32> to vector<8x32xf32>
    %71 = arith.mulf %68, %70 : vector<8x32xf32>
    %c0_26 = arith.constant 0 : index
    %c0_27 = arith.constant 0 : index
    %72 = vector.load %arg9[%c0_26, %c0_27] : memref<1x32xf32, #tpu.memory_space<vmem>>, vector<1x32xf32>
    %73 = vector.broadcast %72 : vector<1x32xf32> to vector<8x32xf32>
    %74 = arith.addf %71, %73 : vector<8x32xf32>
    %75 = math.tanh %74 : vector<8x32xf32>
    %76 = arith.truncf %75 : vector<8x32xf32> to vector<8x32xbf16>
    %c0_28 = arith.constant 0 : index
    %c0_29 = arith.constant 0 : index
    %77 = vector.load %arg10[%c0_28, %c0_29] : memref<32x256xbf16, #tpu.memory_space<vmem>>, vector<32x256xbf16>
    %cst_30 = arith.constant dense<0.000000e+00> : vector<8x256xf32>
    %78 = tpu.matmul %76, %77, %cst_30 {dimension_numbers = #tpu.dot_dimension_numbers<[1], [0], [0], [1], [0, 0, 1, 1], [], []>} : vector<8x32xbf16>, vector<32x256xbf16>, vector<8x256xf32> -> vector<8x256xf32>
    %c0_31 = arith.constant 0 : index
    %c0_32 = arith.constant 0 : index
    %79 = vector.load %arg11[%c0_31, %c0_32] : memref<1x256xf32, #tpu.memory_space<vmem>>, vector<1x256xf32>
    %80 = vector.broadcast %79 : vector<1x256xf32> to vector<8x256xf32>
    %81 = arith.addf %78, %80 : vector<8x256xf32>
    %cst_33 = arith.constant 0.00999999977 : f32
    %82 = vector.broadcast %cst_33 : f32 to vector<8x256xf32>
    %83 = arith.mulf %82, %81 : vector<8x256xf32>
    %84 = arith.maximumf %81, %83 : vector<8x256xf32>
    %85 = arith.truncf %84 : vector<8x256xf32> to vector<8x256xbf16>
    %c0_34 = arith.constant 0 : index
    %c0_35 = arith.constant 0 : index
    %86 = vector.load %arg12[%c0_34, %c0_35] : memref<256x32xbf16, #tpu.memory_space<vmem>>, vector<256x32xbf16>
    %cst_36 = arith.constant dense<0.000000e+00> : vector<8x32xf32>
    %87 = tpu.matmul %85, %86, %cst_36 {dimension_numbers = #tpu.dot_dimension_numbers<[1], [0], [0], [1], [0, 0, 1, 1], [], []>} : vector<8x256xbf16>, vector<256x32xbf16>, vector<8x32xf32> -> vector<8x32xf32>
    %c0_37 = arith.constant 0 : index
    %c0_38 = arith.constant 0 : index
    %88 = vector.load %arg13[%c0_37, %c0_38] : memref<1x32xf32, #tpu.memory_space<vmem>>, vector<1x32xf32>
    %89 = vector.broadcast %88 : vector<1x32xf32> to vector<8x32xf32>
    %90 = arith.addf %87, %89 : vector<8x32xf32>
    %91 = math.tanh %90 : vector<8x32xf32>
    %c0_39 = arith.constant 0 : index
    %c0_40 = arith.constant 0 : index
    %92 = vector.load %arg14[%c0_39, %c0_40] : memref<8x32xf32, #tpu.memory_space<vmem>>, vector<8x32xf32>
    tpu.vector_store %arg14[%c0_39, %c0_40], %91 {strides = array<i32>} : memref<8x32xf32, #tpu.memory_space<vmem>>, vector<8x32xf32>,
    return
  }
  func.func @transform_0(%arg0: i32) -> (i32, i32) {
    %c0_i32 = arith.constant 0 : i32
    %c0_i32_0 = arith.constant 0 : i32
    return %arg0, %c0_i32 : i32, i32
  }
  func.func @transform_1(%arg0: i32) -> (i32, i32) {
    %c0_i32 = arith.constant 0 : i32
    %c0_i32_0 = arith.constant 0 : i32
    return %arg0, %c0_i32 : i32, i32
  }
  func.func @transform_2(%arg0: i32) -> (i32, i32) {
    %c0_i32 = arith.constant 0 : i32
    %c0_i32_0 = arith.constant 0 : i32
    %c0_i32_1 = arith.constant 0 : i32
    return %c0_i32, %c0_i32_0 : i32, i32
  }
  func.func @transform_3(%arg0: i32) -> (i32, i32) {
    %c0_i32 = arith.constant 0 : i32
    %c0_i32_0 = arith.constant 0 : i32
    %c0_i32_1 = arith.constant 0 : i32
    return %c0_i32, %c0_i32_0 : i32, i32
  }
  func.func @transform_4(%arg0: i32) -> (i32, i32) {
    %c0_i32 = arith.constant 0 : i32
    %c0_i32_0 = arith.constant 0 : i32
    %c0_i32_1 = arith.constant 0 : i32
    return %c0_i32, %c0_i32_0 : i32, i32
  }
  func.func @transform_5(%arg0: i32) -> (i32, i32) {
    %c0_i32 = arith.constant 0 : i32
    %c0_i32_0 = arith.constant 0 : i32
    %c0_i32_1 = arith.constant 0 : i32
    return %c0_i32, %c0_i32_0 : i32, i32
  }
  func.func @transform_6(%arg0: i32) -> (i32, i32) {
    %c0_i32 = arith.constant 0 : i32
    %c0_i32_0 = arith.constant 0 : i32
    %c0_i32_1 = arith.constant 0 : i32
    return %c0_i32, %c0_i32_0 : i32, i32
  }
  func.func @transform_7(%arg0: i32) -> (i32, i32) {
    %c0_i32 = arith.constant 0 : i32
    %c0_i32_0 = arith.constant 0 : i32
    %c0_i32_1 = arith.constant 0 : i32
    return %c0_i32, %c0_i32_0 : i32, i32
  }
  func.func @transform_8(%arg0: i32) -> (i32, i32) {
    %c0_i32 = arith.constant 0 : i32
    %c0_i32_0 = arith.constant 0 : i32
    %c0_i32_1 = arith.constant 0 : i32
    return %c0_i32, %c0_i32_0 : i32, i32
  }
  func.func @transform_9(%arg0: i32) -> (i32, i32) {
    %c0_i32 = arith.constant 0 : i32
    %c0_i32_0 = arith.constant 0 : i32
    %c0_i32_1 = arith.constant 0 : i32
    return %c0_i32, %c0_i32_0 : i32, i32
  }
  func.func @transform_10(%arg0: i32) -> (i32, i32) {
    %c0_i32 = arith.constant 0 : i32
    %c0_i32_0 = arith.constant 0 : i32
    %c0_i32_1 = arith.constant 0 : i32
    return %c0_i32, %c0_i32_0 : i32, i32
  }
  func.func @transform_11(%arg0: i32) -> (i32, i32) {
    %c0_i32 = arith.constant 0 : i32
    %c0_i32_0 = arith.constant 0 : i32
    %c0_i32_1 = arith.constant 0 : i32
    return %c0_i32, %c0_i32_0 : i32, i32
  }
  func.func @transform_12(%arg0: i32) -> (i32, i32) {
    %c0_i32 = arith.constant 0 : i32
    %c0_i32_0 = arith.constant 0 : i32
    %c0_i32_1 = arith.constant 0 : i32
    return %c0_i32, %c0_i32_0 : i32, i32
  }
  func.func @transform_13(%arg0: i32) -> (i32, i32) {
    %c0_i32 = arith.constant 0 : i32
    %c0_i32_0 = arith.constant 0 : i32
    return %arg0, %c0_i32 : i32, i32
  }
}

</mosaic_0001>

<llo_original>
// kernel: tpu_custom_call.1
$region0: #{tpu_custom_call.1}
  #allocation0 [shape = 'u32[]', space=smem, size = 0x4, offset = 0x4, fixed_abs, tag = 'smem constant byte address 0x4 - core index']
  #allocation1 [shape = 'u32[144,128]{1,0:T(1,128)}', space=vmem, size = 0x12000, scoped, tag = 'internal scratch']
  %s0 = inlined_call_operand.vmem [shape: f32[8,32], index: 0, kind: input, shape index: {}]
  %s1 = inlined_call_operand.vmem [shape: f32[8,4], index: 1, kind: input, shape index: {}]
  %s2 = inlined_call_operand.vmem [shape: bf16[32,256], index: 2, kind: input, shape index: {}]
  %s3 = inlined_call_operand.vmem [shape: f32[8,256], index: 3, kind: input, shape index: {}]
  %s4 = inlined_call_operand.vmem [shape: f32[1,256], index: 4, kind: input, shape index: {}]
  %s5 = inlined_call_operand.vmem [shape: bf16[256,32], index: 5, kind: input, shape index: {}]
  %s6 = inlined_call_operand.vmem [shape: f32[1,32], index: 6, kind: input, shape index: {}]
  %s7 = inlined_call_operand.vmem [shape: f32[1,32], index: 7, kind: input, shape index: {}]
  %s8 = inlined_call_operand.vmem [shape: f32[1,32], index: 8, kind: input, shape index: {}]
  %s9 = inlined_call_operand.vmem [shape: bf16[32,256], index: 9, kind: input, shape index: {}]
  %s10 = inlined_call_operand.vmem [shape: f32[1,256], index: 10, kind: input, shape index: {}]
  %s11 = inlined_call_operand.vmem [shape: bf16[256,32], index: 11, kind: input, shape index: {}]
  %s12 = inlined_call_operand.vmem [shape: f32[1,32], index: 12, kind: input, shape index: {}]
  %s13 = inlined_call_operand.hbm [shape: f32[8,32], index: 13, kind: output, shape index: {}]
  %s14 = sld [smem:[#allocation0]]
  $region62: #{tpu_custom_call.1} parent=0
    _
  %s16 = ssub.s32 1, %s14
  %s17 = scalar_select 0, %s16, %s14
  $region1: #{tpu_custom_call.1} parent=0
    #allocation2 [shape = 'u8[4096]{0}', space=vmem, size = 0x1000, scoped, tag = 'output window, operand 0, single buffered']
    #allocation3 [shape = 's32[1]{0}', space=sflag, size = 0x4, scoped, tag = 'scoped memory for tpu_custom_call.1']
    %18 = vsyncpa [#allocation3], 0
    // Predicated region
    $region2: #{tpu_custom_call.1} parent=1 // pred_check
      _
    $region3: #{tpu_custom_call.1} parent=1 // pred_check_branch
      %20 = sbr.rel (0) target = $region5
    $region4: #{tpu_custom_call.1} parent=1 // pred_region
      _
    $region5: #{tpu_custom_call.1} parent=1 // pred_fallthru
      _
    // Predicated region
    $region6: #{tpu_custom_call.1} parent=1 // pred_check
      _
    $region7: #{tpu_custom_call.1} parent=1 // pred_check_branch
      %22 = sbr.rel (0) target = $region9
    $region8: #{tpu_custom_call.1} parent=1 // pred_region
      _
    $region9: #{tpu_custom_call.1} parent=1 // pred_fallthru
      _
    // Predicated region
    $region10: #{tpu_custom_call.1} parent=1 // pred_check
      _
    $region11: #{tpu_custom_call.1} parent=1 // pred_check_branch
      %24 = sbr.rel (0) target = $region13
    $region12: #{tpu_custom_call.1} parent=1 // pred_region
      _
    $region13: #{tpu_custom_call.1} parent=1 // pred_fallthru
      _
    // Predicated region
    $region14: #{tpu_custom_call.1} parent=1 // pred_check
      _
    $region15: #{tpu_custom_call.1} parent=1 // pred_check_branch
      %26 = sbr.rel (0) target = $region17
    $region16: #{tpu_custom_call.1} parent=1 // pred_region
      _
    $region17: #{tpu_custom_call.1} parent=1 // pred_fallthru
      _
    // Predicated region
    $region18: #{tpu_custom_call.1} parent=1 // pred_check
      _
    $region19: #{tpu_custom_call.1} parent=1 // pred_check_branch
      %28 = sbr.rel (0) target = $region21
    $region20: #{tpu_custom_call.1} parent=1 // pred_region
      _
    $region21: #{tpu_custom_call.1} parent=1 // pred_fallthru
      _
    // Predicated region
    $region22: #{tpu_custom_call.1} parent=1 // pred_check
      _
    $region23: #{tpu_custom_call.1} parent=1 // pred_check_branch
      %30 = sbr.rel (0) target = $region25
    $region24: #{tpu_custom_call.1} parent=1 // pred_region
      _
    $region25: #{tpu_custom_call.1} parent=1 // pred_fallthru
      _
    // Predicated region
    $region26: #{tpu_custom_call.1} parent=1 // pred_check
      _
    $region27: #{tpu_custom_call.1} parent=1 // pred_check_branch
      %32 = sbr.rel (0) target = $region29
    $region28: #{tpu_custom_call.1} parent=1 // pred_region
      _
    $region29: #{tpu_custom_call.1} parent=1 // pred_fallthru
      _
    // Predicated region
    $region30: #{tpu_custom_call.1} parent=1 // pred_check
      _
    $region31: #{tpu_custom_call.1} parent=1 // pred_check_branch
      %34 = sbr.rel (0) target = $region33
    $region32: #{tpu_custom_call.1} parent=1 // pred_region
      _
    $region33: #{tpu_custom_call.1} parent=1 // pred_fallthru
      _
    // Predicated region
    $region34: #{tpu_custom_call.1} parent=1 // pred_check
      _
    $region35: #{tpu_custom_call.1} parent=1 // pred_check_branch
      %36 = sbr.rel (0) target = $region37
    $region36: #{tpu_custom_call.1} parent=1 // pred_region
      _
    $region37: #{tpu_custom_call.1} parent=1 // pred_fallthru
      _
    // Predicated region
    $region38: #{tpu_custom_call.1} parent=1 // pred_check
      _
    $region39: #{tpu_custom_call.1} parent=1 // pred_check_branch
      %38 = sbr.rel (0) target = $region41
    $region40: #{tpu_custom_call.1} parent=1 // pred_region
      _
    $region41: #{tpu_custom_call.1} parent=1 // pred_fallthru
      _
    // Predicated region
    $region42: #{tpu_custom_call.1} parent=1 // pred_check
      _
    $region43: #{tpu_custom_call.1} parent=1 // pred_check_branch
      %40 = sbr.rel (0) target = $region45
    $region44: #{tpu_custom_call.1} parent=1 // pred_region
      _
    $region45: #{tpu_custom_call.1} parent=1 // pred_fallthru
      _
    // Predicated region
    $region46: #{tpu_custom_call.1} parent=1 // pred_check
      _
    $region47: #{tpu_custom_call.1} parent=1 // pred_check_branch
      %42 = sbr.rel (0) target = $region49
    $region48: #{tpu_custom_call.1} parent=1 // pred_region
      _
    $region49: #{tpu_custom_call.1} parent=1 // pred_fallthru
      _
    // Predicated region
    $region50: #{tpu_custom_call.1} parent=1 // pred_check
      _
    $region51: #{tpu_custom_call.1} parent=1 // pred_check_branch
      %44 = sbr.rel (0) target = $region53
    $region52: #{tpu_custom_call.1} parent=1 // pred_region
      _
    $region53: #{tpu_custom_call.1} parent=1 // pred_fallthru
      _
    %v46 = vld [vmem:[%s0] sm:$0xff]
    %v47 = vld [vmem:[%s1] sm:$0xff]
    %v48 = vpack.c.bf16 %v46, %v46
    %v49 = vld [vmem:[%s2] sm:$0xff]
    %v50 = vld [vmem:[%s2 + $0x8] sm:$0xff]
    %v51 = vld [vmem:[%s2 + $0x10] sm:$0xff]
    %v52 = vld [vmem:[%s2 + $0x18] sm:$0xff]
    %v53 = vld [vmem:[%s4] sm:$0x3]
    %v55 = vlaneseq
    %v56 = vshrl.u32 %v55, 7
    %v57 = vsub.s32 0, %v56
    %v58 = vrot.slane %v53, %v57
    %v59 = vlaneseq
    %v60 = vshrl.u32 %v59, 7
    %v61 = vsub.s32 1, %v60
    %v62 = vrot.slane %v53, %v61
    %v69 = vunpack.c.l.b16 %v49
    %v70 = vunpack.c.h.b16 %v49
    %v71 = vunpack.c.l.b16 %v50
    %v72 = vunpack.c.h.b16 %v50
    %v73 = vunpack.c.l.b16 %v51
    %v74 = vunpack.c.h.b16 %v51
    %v75 = vunpack.c.l.b16 %v52
    %v76 = vunpack.c.h.b16 %v52
    %v77 = vpack.c.b16 %v71, %v69
    %v78 = vpack.c.b16 %v72, %v70
    %v79 = vpack.c.b16 %v75, %v73
    %v80 = vpack.c.b16 %v76, %v74
    %vm85 = vcmask 261120
    %v87 = vsel %vm85, %v48, 0
    %89 = vmatprep.subr.bf16.mxu0 0
    %90 = vmatpush1.bf16.msra.mxu0 0
    %91 = vmatprep.subr.bf16.mxu0 0
    %92 = vmatpush1.bf16.msra.mxu0 0
    %93 = vmatprep.subr.bf16.mxu0 0
    %94 = vmatpush1.bf16.msra.mxu0 0
    %95 = vmatprep.subr.bf16.mxu0 0
    %96 = vmatpush1.bf16.msra.mxu0 0
    %97 = vmatprep.subr.bf16.mxu0 0
    %98 = vmatpush1.bf16.msra.mxu0 0
    %99 = vmatprep.subr.bf16.mxu0 0
    %100 = vmatpush1.bf16.msra.mxu0 0
    %101 = vmatprep.subr.bf16.mxu0 %v80
    %102 = vmatpush1.bf16.msra.mxu0 %v79
    %103 = vmatprep.subr.bf16.mxu0 %v78
    %104 = vmatpush1.bf16.msra.mxu0 %v77
    %105 = vmatprep.subr.bf16.mxu0 0
    %106 = vmatpush2.bf16.msra.mxu0 0
    %107 = vmatprep.subr.bf16.mxu0 0
    %108 = vmatpush2.bf16.msra.mxu0 0
    %109 = vmatprep.subr.bf16.mxu0 0
    %110 = vmatpush2.bf16.msra.mxu0 0
    %111 = vmatprep.subr.bf16.mxu0 0
    %112 = vmatpush2.bf16.msra.mxu0 0
    %113 = vmatprep.subr.bf16.mxu0 0
    %114 = vmatpush2.bf16.msra.mxu0 0
    %115 = vmatprep.subr.bf16.mxu0 0
    %116 = vmatpush2.bf16.msra.mxu0 0
    %117 = vmatprep.subr.bf16.mxu0 0
    %118 = vmatpush2.bf16.msra.mxu0 0
    %119 = vmatprep.subr.bf16.mxu0 0
    %120 = vmatpush2.bf16.msra.mxu0 0
    %121 = vmatprep.mubr.bf16.mxu0 0
    %122 = vmatmul.mubr.bf16.gmra.mxu0 %v87
    %v123 = vpop.f32.mrf.mxu0
    %v124 = vadd.f32 %v58, %v123
    %v125 = vpop.f32.mrf.mxu0
    %v126 = vadd.f32 %v62, %v125
    %v127 = vpop.f32.mrf.mxu0
    %v128 = vpop.f32.mrf.mxu0
    %129 = vdwg.mxu0
    %v130 = vld [vmem:[%s3] ss:$8 sm:$0x3]
    %132 = vset.pattern.permute.xlu0 0
    %133 = vperm.xlu0 %132, %v47
    %v134 = vpop.permute.xlu0 %133
    %v137 = vlaneseq
    %v138 = vshrl.u32 %v137, 7
    %v139 = vsub.s32 0, %v138
    %v140 = vrot.slane %v130, %v139
    %v141 = vlaneseq
    %v142 = vshrl.u32 %v141, 7
    %v143 = vsub.s32 1, %v142
    %v144 = vrot.slane %v130, %v143
    %v147 = vmul.f32 %v134, %v140
    %v148 = vmul.f32 %v134, %v144
    %v149 = vadd.f32 %v124, %v147
    %v150 = vadd.f32 %v126, %v148
    %s151 = scalar_lea.vmem %s3, 1
    %v152 = vld [vmem:[%s151] ss:$8 sm:$0x3]
    %153 = vset.pattern.permute.xlu0 1
    %154 = vperm.xlu0 %153, %v47
    %v155 = vpop.permute.xlu0 %154
    %v158 = vlaneseq
    %v159 = vshrl.u32 %v158, 7
    %v160 = vsub.s32 0, %v159
    %v161 = vrot.slane %v152, %v160
    %v162 = vlaneseq
    %v163 = vshrl.u32 %v162, 7
    %v164 = vsub.s32 1, %v163
    %v165 = vrot.slane %v152, %v164
    %v168 = vmul.f32 %v155, %v161
    %v169 = vmul.f32 %v155, %v165
    %v170 = vadd.f32 %v149, %v168
    %v171 = vadd.f32 %v150, %v169
    %s172 = scalar_lea.vmem %s3, 2
    %v173 = vld [vmem:[%s172] ss:$8 sm:$0x3]
    %174 = vset.pattern.permute.xlu0 2
    %175 = vperm.xlu0 %174, %v47
    %v176 = vpop.permute.xlu0 %175
    %v179 = vlaneseq
    %v180 = vshrl.u32 %v179, 7
    %v181 = vsub.s32 0, %v180
    %v182 = vrot.slane %v173, %v181
    %v183 = vlaneseq
    %v184 = vshrl.u32 %v183, 7
    %v185 = vsub.s32 1, %v184
    %v186 = vrot.slane %v173, %v185
    %v189 = vmul.f32 %v176, %v182
    %v190 = vmul.f32 %v176, %v186
    %v191 = vadd.f32 %v170, %v189
    %v192 = vadd.f32 %v171, %v190
    %s193 = scalar_lea.vmem %s3, 3
    %v194 = vld [vmem:[%s193] ss:$8 sm:$0x3]
    %195 = vset.pattern.permute.xlu0 3
    %196 = vperm.xlu0 %195, %v47
    %v197 = vpop.permute.xlu0 %196
    %v200 = vlaneseq
    %v201 = vshrl.u32 %v200, 7
    %v202 = vsub.s32 0, %v201
    %v203 = vrot.slane %v194, %v202
    %v204 = vlaneseq
    %v205 = vshrl.u32 %v204, 7
    %v206 = vsub.s32 1, %v205
    %v207 = vrot.slane %v194, %v206
    %v210 = vmul.f32 %v197, %v203
    %v211 = vmul.f32 %v197, %v207
    %v212 = vadd.f32 %v191, %v210
    %v213 = vadd.f32 %v192, %v211
    %v214 = vmul.f32 %v212, 0.01
    %v215 = vmul.f32 %v213, 0.01
    %v216 = vmax.f32 %v212, %v214
    %v217 = vmax.f32 %v213, %v215
    %v218 = vpack.c.bf16 %v216, %v216
    %v219 = vpack.c.bf16 %v217, %v217
    %v220 = vld [vmem:[%s5] sm:$0xf]
    %v221 = vld [vmem:[%s5 + $0x4] sm:$0xf]
    %v222 = vld [vmem:[%s5 + $0x8] sm:$0xf]
    %v223 = vld [vmem:[%s5 + $0xc] sm:$0xf]
    %v224 = vld [vmem:[%s5 + $0x10] sm:$0xf]
    %v225 = vld [vmem:[%s5 + $0x14] sm:$0xf]
    %v226 = vld [vmem:[%s5 + $0x18] sm:$0xf]
    %v227 = vld [vmem:[%s5 + $0x1c] sm:$0xf]
    %v228 = vld [vmem:[%s5 + $0x20] sm:$0xf]
    %v229 = vld [vmem:[%s5 + $0x24] sm:$0xf]
    %v230 = vld [vmem:[%s5 + $0x28] sm:$0xf]
    %v231 = vld [vmem:[%s5 + $0x2c] sm:$0xf]
    %v232 = vld [vmem:[%s5 + $0x30] sm:$0xf]
    %v233 = vld [vmem:[%s5 + $0x34] sm:$0xf]
    %v234 = vld [vmem:[%s5 + $0x38] sm:$0xf]
    %v235 = vld [vmem:[%s5 + $0x3c] sm:$0xf]
    %v236 = vld [vmem:[%s5 + $0x40] sm:$0xf]
    %v237 = vld [vmem:[%s5 + $0x44] sm:$0xf]
    %v238 = vld [vmem:[%s5 + $0x48] sm:$0xf]
    %v239 = vld [vmem:[%s5 + $0x4c] sm:$0xf]
    %v240 = vld [vmem:[%s5 + $0x50] sm:$0xf]
    %v241 = vld [vmem:[%s5 + $0x54] sm:$0xf]
    %v242 = vld [vmem:[%s5 + $0x58] sm:$0xf]
    %v243 = vld [vmem:[%s5 + $0x5c] sm:$0xf]
    %v244 = vld [vmem:[%s5 + $0x60] sm:$0xf]
    %v245 = vld [vmem:[%s5 + $0x64] sm:$0xf]
    %v246 = vld [vmem:[%s5 + $0x68] sm:$0xf]
    %v247 = vld [vmem:[%s5 + $0x6c] sm:$0xf]
    %v248 = vld [vmem:[%s5 + $0x70] sm:$0xf]
    %v249 = vld [vmem:[%s5 + $0x74] sm:$0xf]
    %v250 = vld [vmem:[%s5 + $0x78] sm:$0xf]
    %v251 = vld [vmem:[%s5 + $0x7c] sm:$0xf]
    %v252 = vld [vmem:[%s6] sm:$0x1]
    %v254 = vlaneseq
    %v255 = vshrl.u32 %v254, 7
    %v256 = vsub.s32 0, %v255
    %v257 = vrot.slane %v252, %v256
    %v291 = vunpack.c.l.b16 %v220
    %v292 = vunpack.c.l.b16 %v221
    %v293 = vunpack.c.l.b16 %v222
    %v294 = vunpack.c.l.b16 %v223
    %v295 = vunpack.c.l.b16 %v224
    %v296 = vunpack.c.l.b16 %v225
    %v297 = vunpack.c.l.b16 %v226
    %v298 = vunpack.c.l.b16 %v227
    %v299 = vunpack.c.l.b16 %v228
    %v300 = vunpack.c.l.b16 %v229
    %v301 = vunpack.c.l.b16 %v230
    %v302 = vunpack.c.l.b16 %v231
    %v303 = vunpack.c.l.b16 %v232
    %v304 = vunpack.c.l.b16 %v233
    %v305 = vunpack.c.l.b16 %v234
    %v306 = vunpack.c.l.b16 %v235
    %v307 = vunpack.c.l.b16 %v236
    %v308 = vunpack.c.l.b16 %v237
    %v309 = vunpack.c.l.b16 %v238
    %v310 = vunpack.c.l.b16 %v239
    %v311 = vunpack.c.l.b16 %v240
    %v312 = vunpack.c.l.b16 %v241
    %v313 = vunpack.c.l.b16 %v242
    %v314 = vunpack.c.l.b16 %v243
    %v315 = vunpack.c.l.b16 %v244
    %v316 = vunpack.c.l.b16 %v245
    %v317 = vunpack.c.l.b16 %v246
    %v318 = vunpack.c.l.b16 %v247
    %v319 = vunpack.c.l.b16 %v248
    %v320 = vunpack.c.l.b16 %v249
    %v321 = vunpack.c.l.b16 %v250
    %v322 = vunpack.c.l.b16 %v251
    %v323 = vpack.c.b16 %v292, %v291
    %v324 = vpack.c.b16 %v294, %v293
    %v325 = vpack.c.b16 %v296, %v295
    %v326 = vpack.c.b16 %v298, %v297
    %v327 = vpack.c.b16 %v300, %v299
    %v328 = vpack.c.b16 %v302, %v301
    %v329 = vpack.c.b16 %v304, %v303
    %v330 = vpack.c.b16 %v306, %v305
    %v331 = vpack.c.b16 %v308, %v307
    %v332 = vpack.c.b16 %v310, %v309
    %v333 = vpack.c.b16 %v312, %v311
    %v334 = vpack.c.b16 %v314, %v313
    %v335 = vpack.c.b16 %v316, %v315
    %v336 = vpack.c.b16 %v318, %v317
    %v337 = vpack.c.b16 %v320, %v319
    %v338 = vpack.c.b16 %v322, %v321
    %355 = vmatprep.subr.bf16.mxu0 0
    %356 = vmatpush1.bf16.msra.mxu0 %v330
    %357 = vmatprep.subr.bf16.mxu0 0
    %358 = vmatpush1.bf16.msra.mxu0 %v329
    %359 = vmatprep.subr.bf16.mxu0 0
    %360 = vmatpush1.bf16.msra.mxu0 %v328
    %361 = vmatprep.subr.bf16.mxu0 0
    %362 = vmatpush1.bf16.msra.mxu0 %v327
    %363 = vmatprep.subr.bf16.mxu0 0
    %364 = vmatpush1.bf16.msra.mxu0 %v326
    %365 = vmatprep.subr.bf16.mxu0 0
    %366 = vmatpush1.bf16.msra.mxu0 %v325
    %367 = vmatprep.subr.bf16.mxu0 0
    %368 = vmatpush1.bf16.msra.mxu0 %v324
    %369 = vmatprep.subr.bf16.mxu0 0
    %370 = vmatpush1.bf16.msra.mxu0 %v323
    %371 = vmatprep.subr.bf16.mxu0 0
    %372 = vmatpush2.bf16.msra.mxu0 %v338
    %373 = vmatprep.subr.bf16.mxu0 0
    %374 = vmatpush2.bf16.msra.mxu0 %v337
    %375 = vmatprep.subr.bf16.mxu0 0
    %376 = vmatpush2.bf16.msra.mxu0 %v336
    %377 = vmatprep.subr.bf16.mxu0 0
    %378 = vmatpush2.bf16.msra.mxu0 %v335
    %379 = vmatprep.subr.bf16.mxu0 0
    %380 = vmatpush2.bf16.msra.mxu0 %v334
    %381 = vmatprep.subr.bf16.mxu0 0
    %382 = vmatpush2.bf16.msra.mxu0 %v333
    %383 = vmatprep.subr.bf16.mxu0 0
    %384 = vmatpush2.bf16.msra.mxu0 %v332
    %385 = vmatprep.subr.bf16.mxu0 0
    %386 = vmatpush2.bf16.msra.mxu0 %v331
    %387 = vmatprep.mubr.bf16.mxu0 %v219
    %388 = vmatmul.mubr.bf16.gmra.mxu0 %v218
    %v389 = vpop.f32.mrf.mxu0
    %v390 = vadd.f32 %v257, %v389
    %v391 = vpop.f32.mrf.mxu0
    %v392 = vpop.f32.mrf.mxu0
    %v393 = vpop.f32.mrf.mxu0
    %394 = vdwg.mxu0
    %v395 = vsel %vm85, %v390, 0.0
    %396 = vadd.xlane.f32.xlu0 %v395
    %v397 = vpop.xlane.xlu0 %396
    %v398 = vrcp.pop 32.0
    %v399 = vmul.f32 %v397, %v398
    %v400 = vmul.f32 %v390, %v390
    %v401 = vsel %vm85, %v400, 0.0
    %402 = vadd.xlane.f32.xlu0 %v401
    %v403 = vpop.xlane.xlu0 %402
    %v404 = vmul.f32 %v403, %v398
    %v405 = vmul.f32 %v399, %v399
    %v406 = vsub.f32 %v404, %v405
    %v407 = vmax.f32 %v406, 0.0
    %v408 = vsub.f32 %v390, %v399
    %v409 = vadd.f32 %v407, 1e-05
    %v410 = vrsqrt.pop %v409
    %v411 = vmul.f32 %v408, %v410
    %v412 = vld [vmem:[%s7] sm:$0x1]
    %v414 = vlaneseq
    %v415 = vshrl.u32 %v414, 7
    %v416 = vsub.s32 0, %v415
    %v417 = vrot.slane %v412, %v416
    %v419 = vmul.f32 %v411, %v417
    %v420 = vld [vmem:[%s8] sm:$0x1]
    %v422 = vlaneseq
    %v423 = vshrl.u32 %v422, 7
    %v424 = vsub.s32 0, %v423
    %v425 = vrot.slane %v420, %v424
    %v427 = vadd.f32 %v419, %v425
    %v428 = vtanh.pop %v427
    %v429 = vpack.c.bf16 %v428, %v428
    %v430 = vld [vmem:[%s9] sm:$0xff]
    %v431 = vld [vmem:[%s9 + $0x8] sm:$0xff]
    %v432 = vld [vmem:[%s9 + $0x10] sm:$0xff]
    %v433 = vld [vmem:[%s9 + $0x18] sm:$0xff]
    %v434 = vld [vmem:[%s10] sm:$0x3]
    %v436 = vlaneseq
    %v437 = vshrl.u32 %v436, 7
    %v438 = vsub.s32 0, %v437
    %v439 = vrot.slane %v434, %v438
    %v440 = vlaneseq
    %v441 = vshrl.u32 %v440, 7
    %v442 = vsub.s32 1, %v441
    %v443 = vrot.slane %v434, %v442
    %v450 = vunpack.c.l.b16 %v430
    %v451 = vunpack.c.h.b16 %v430
    %v452 = vunpack.c.l.b16 %v431
    %v453 = vunpack.c.h.b16 %v431
    %v454 = vunpack.c.l.b16 %v432
    %v455 = vunpack.c.h.b16 %v432
    %v456 = vunpack.c.l.b16 %v433
    %v457 = vunpack.c.h.b16 %v433
    %v458 = vpack.c.b16 %v452, %v450
    %v459 = vpack.c.b16 %v453, %v451
    %v460 = vpack.c.b16 %v456, %v454
    %v461 = vpack.c.b16 %v457, %v455
    %v467 = vsel %vm85, %v429, 0
    %469 = vmatprep.subr.bf16.mxu0 0
    %470 = vmatpush1.bf16.msra.mxu0 0
    %471 = vmatprep.subr.bf16.mxu0 0
    %472 = vmatpush1.bf16.msra.mxu0 0
    %473 = vmatprep.subr.bf16.mxu0 0
    %474 = vmatpush1.bf16.msra.mxu0 0
    %475 = vmatprep.subr.bf16.mxu0 0
    %476 = vmatpush1.bf16.msra.mxu0 0
    %477 = vmatprep.subr.bf16.mxu0 0
    %478 = vmatpush1.bf16.msra.mxu0 0
    %479 = vmatprep.subr.bf16.mxu0 0
    %480 = vmatpush1.bf16.msra.mxu0 0
    %481 = vmatprep.subr.bf16.mxu0 %v461
    %482 = vmatpush1.bf16.msra.mxu0 %v460
    %483 = vmatprep.subr.bf16.mxu0 %v459
    %484 = vmatpush1.bf16.msra.mxu0 %v458
    %485 = vmatprep.subr.bf16.mxu0 0
    %486 = vmatpush2.bf16.msra.mxu0 0
    %487 = vmatprep.subr.bf16.mxu0 0
    %488 = vmatpush2.bf16.msra.mxu0 0
    %489 = vmatprep.subr.bf16.mxu0 0
    %490 = vmatpush2.bf16.msra.mxu0 0
    %491 = vmatprep.subr.bf16.mxu0 0
    %492 = vmatpush2.bf16.msra.mxu0 0
    %493 = vmatprep.subr.bf16.mxu0 0
    %494 = vmatpush2.bf16.msra.mxu0 0
    %495 = vmatprep.subr.bf16.mxu0 0
    %496 = vmatpush2.bf16.msra.mxu0 0
    %497 = vmatprep.subr.bf16.mxu0 0
    %498 = vmatpush2.bf16.msra.mxu0 0
    %499 = vmatprep.subr.bf16.mxu0 0
    %500 = vmatpush2.bf16.msra.mxu0 0
    %501 = vmatprep.mubr.bf16.mxu0 0
    %502 = vmatmul.mubr.bf16.gmra.mxu0 %v467
    %v503 = vpop.f32.mrf.mxu0
    %v504 = vadd.f32 %v439, %v503
    %v505 = vpop.f32.mrf.mxu0
    %v506 = vadd.f32 %v443, %v505
    %v507 = vpop.f32.mrf.mxu0
    %v508 = vpop.f32.mrf.mxu0
    %509 = vdwg.mxu0
    %v510 = vmul.f32 %v504, 0.01
    %v511 = vmul.f32 %v506, 0.01
    %v512 = vmax.f32 %v504, %v510
    %v513 = vmax.f32 %v506, %v511
    %v514 = vpack.c.bf16 %v512, %v512
    %v515 = vpack.c.bf16 %v513, %v513
    %v516 = vld [vmem:[%s11] sm:$0xf]
    %v517 = vld [vmem:[%s11 + $0x4] sm:$0xf]
    %v518 = vld [vmem:[%s11 + $0x8] sm:$0xf]
    %v519 = vld [vmem:[%s11 + $0xc] sm:$0xf]
    %v520 = vld [vmem:[%s11 + $0x10] sm:$0xf]
    %v521 = vld [vmem:[%s11 + $0x14] sm:$0xf]
    %v522 = vld [vmem:[%s11 + $0x18] sm:$0xf]
    %v523 = vld [vmem:[%s11 + $0x1c] sm:$0xf]
    %v524 = vld [vmem:[%s11 + $0x20] sm:$0xf]
    %v525 = vld [vmem:[%s11 + $0x24] sm:$0xf]
    %v526 = vld [vmem:[%s11 + $0x28] sm:$0xf]
    %v527 = vld [vmem:[%s11 + $0x2c] sm:$0xf]
    %v528 = vld [vmem:[%s11 + $0x30] sm:$0xf]
    %v529 = vld [vmem:[%s11 + $0x34] sm:$0xf]
    %v530 = vld [vmem:[%s11 + $0x38] sm:$0xf]
    %v531 = vld [vmem:[%s11 + $0x3c] sm:$0xf]
    %v532 = vld [vmem:[%s11 + $0x40] sm:$0xf]
    %v533 = vld [vmem:[%s11 + $0x44] sm:$0xf]
    %v534 = vld [vmem:[%s11 + $0x48] sm:$0xf]
    %v535 = vld [vmem:[%s11 + $0x4c] sm:$0xf]
    %v536 = vld [vmem:[%s11 + $0x50] sm:$0xf]
    %v537 = vld [vmem:[%s11 + $0x54] sm:$0xf]
    %v538 = vld [vmem:[%s11 + $0x58] sm:$0xf]
    %v539 = vld [vmem:[%s11 + $0x5c] sm:$0xf]
    %v540 = vld [vmem:[%s11 + $0x60] sm:$0xf]
    %v541 = vld [vmem:[%s11 + $0x64] sm:$0xf]
    %v542 = vld [vmem:[%s11 + $0x68] sm:$0xf]
    %v543 = vld [vmem:[%s11 + $0x6c] sm:$0xf]
    %v544 = vld [vmem:[%s11 + $0x70] sm:$0xf]
    %v545 = vld [vmem:[%s11 + $0x74] sm:$0xf]
    %v546 = vld [vmem:[%s11 + $0x78] sm:$0xf]
    %v547 = vld [vmem:[%s11 + $0x7c] sm:$0xf]
    %v548 = vld [vmem:[%s12] sm:$0x1]
    %v550 = vlaneseq
    %v551 = vshrl.u32 %v550, 7
    %v552 = vsub.s32 0, %v551
    %v553 = vrot.slane %v548, %v552
    %v587 = vunpack.c.l.b16 %v516
    %v588 = vunpack.c.l.b16 %v517
    %v589 = vunpack.c.l.b16 %v518
    %v590 = vunpack.c.l.b16 %v519
    %v591 = vunpack.c.l.b16 %v520
    %v592 = vunpack.c.l.b16 %v521
    %v593 = vunpack.c.l.b16 %v522
    %v594 = vunpack.c.l.b16 %v523
    %v595 = vunpack.c.l.b16 %v524
    %v596 = vunpack.c.l.b16 %v525
    %v597 = vunpack.c.l.b16 %v526
    %v598 = vunpack.c.l.b16 %v527
    %v599 = vunpack.c.l.b16 %v528
    %v600 = vunpack.c.l.b16 %v529
    %v601 = vunpack.c.l.b16 %v530
    %v602 = vunpack.c.l.b16 %v531
    %v603 = vunpack.c.l.b16 %v532
    %v604 = vunpack.c.l.b16 %v533
    %v605 = vunpack.c.l.b16 %v534
    %v606 = vunpack.c.l.b16 %v535
    %v607 = vunpack.c.l.b16 %v536
    %v608 = vunpack.c.l.b16 %v537
    %v609 = vunpack.c.l.b16 %v538
    %v610 = vunpack.c.l.b16 %v539
    %v611 = vunpack.c.l.b16 %v540
    %v612 = vunpack.c.l.b16 %v541
    %v613 = vunpack.c.l.b16 %v542
    %v614 = vunpack.c.l.b16 %v543
    %v615 = vunpack.c.l.b16 %v544
    %v616 = vunpack.c.l.b16 %v545
    %v617 = vunpack.c.l.b16 %v546
    %v618 = vunpack.c.l.b16 %v547
    %v619 = vpack.c.b16 %v588, %v587
    %v620 = vpack.c.b16 %v590, %v589
    %v621 = vpack.c.b16 %v592, %v591
    %v622 = vpack.c.b16 %v594, %v593
    %v623 = vpack.c.b16 %v596, %v595
    %v624 = vpack.c.b16 %v598, %v597
    %v625 = vpack.c.b16 %v600, %v599
    %v626 = vpack.c.b16 %v602, %v601
    %v627 = vpack.c.b16 %v604, %v603
    %v628 = vpack.c.b16 %v606, %v605
    %v629 = vpack.c.b16 %v608, %v607
    %v630 = vpack.c.b16 %v610, %v609
    %v631 = vpack.c.b16 %v612, %v611
    %v632 = vpack.c.b16 %v614, %v613
    %v633 = vpack.c.b16 %v616, %v615
    %v634 = vpack.c.b16 %v618, %v617
    %651 = vmatprep.subr.bf16.mxu0 0
    %652 = vmatpush1.bf16.msra.mxu0 %v626
    %653 = vmatprep.subr.bf16.mxu0 0
    %654 = vmatpush1.bf16.msra.mxu0 %v625
    %655 = vmatprep.subr.bf16.mxu0 0
    %656 = vmatpush1.bf16.msra.mxu0 %v624
    %657 = vmatprep.subr.bf16.mxu0 0
    %658 = vmatpush1.bf16.msra.mxu0 %v623
    %659 = vmatprep.subr.bf16.mxu0 0
    %660 = vmatpush1.bf16.msra.mxu0 %v622
    %661 = vmatprep.subr.bf16.mxu0 0
    %662 = vmatpush1.bf16.msra.mxu0 %v621
    %663 = vmatprep.subr.bf16.mxu0 0
    %664 = vmatpush1.bf16.msra.mxu0 %v620
    %665 = vmatprep.subr.bf16.mxu0 0
    %666 = vmatpush1.bf16.msra.mxu0 %v619
    %667 = vmatprep.subr.bf16.mxu0 0
    %668 = vmatpush2.bf16.msra.mxu0 %v634
    %669 = vmatprep.subr.bf16.mxu0 0
    %670 = vmatpush2.bf16.msra.mxu0 %v633
    %671 = vmatprep.subr.bf16.mxu0 0
    %672 = vmatpush2.bf16.msra.mxu0 %v632
    %673 = vmatprep.subr.bf16.mxu0 0
    %674 = vmatpush2.bf16.msra.mxu0 %v631
    %675 = vmatprep.subr.bf16.mxu0 0
    %676 = vmatpush2.bf16.msra.mxu0 %v630
    %677 = vmatprep.subr.bf16.mxu0 0
    %678 = vmatpush2.bf16.msra.mxu0 %v629
    %679 = vmatprep.subr.bf16.mxu0 0
    %680 = vmatpush2.bf16.msra.mxu0 %v628
    %681 = vmatprep.subr.bf16.mxu0 0
    %682 = vmatpush2.bf16.msra.mxu0 %v627
    %683 = vmatprep.mubr.bf16.mxu0 %v515
    %684 = vmatmul.mubr.bf16.gmra.mxu0 %v514
    %v685 = vpop.f32.mrf.mxu0
    %v686 = vadd.f32 %v553, %v685
    %v687 = vpop.f32.mrf.mxu0
    %v688 = vpop.f32.mrf.mxu0
    %v689 = vpop.f32.mrf.mxu0
    %690 = vdwg.mxu0
    %v691 = vtanh.pop %v686
    %692 = vst.msk [vmem:[#allocation2] sm:$0xff] %vm85, %v691
    // Predicated region
    $region54: #{tpu_custom_call.1} parent=1 // pred_check
      _
    $region55: #{tpu_custom_call.1} parent=1 // pred_check_branch
      %694 = sbr.rel (0) target = $region57
    $region56: #{tpu_custom_call.1} parent=1 // pred_region
      %s696 = ssub.s32 128, 128
      %697 = vsyncadd [#allocation3], %s696
      %s699 = sshll.u32 [#allocation2], 4
      %s700 = int_to_ptr.vmem [resolvable:$true] %s699
      %702 = dma.vmem_to_hbm [thread:$0]  %s700, 128, %s13, [#allocation3]
    $region57: #{tpu_custom_call.1} parent=1 // pred_fallthru
      _
    // Predicated region
    $region58: #{tpu_custom_call.1} parent=1 // pred_check
      _
    $region59: #{tpu_custom_call.1} parent=1 // pred_check_branch
      %704 = sbr.rel (0) target = $region61
    $region60: #{tpu_custom_call.1} parent=1 // pred_region
      %705 = dma.done [#allocation3], 128
    $region61: #{tpu_custom_call.1} parent=1 // pred_fallthru
      _
    %706 = vsyncpa [#allocation3], 1

</llo_original>
